<compile_context>
chip_gen: v6e
topology: v6e:2x2x1
jax: 0.10.0
libtpu: 0.0.40
codegen_flags: <defaults>
</compile_context>

<pallas_src>
import math

import jax
import jax.numpy as jnp
from jax import lax
from jax.experimental import pallas as pl
from jax.experimental.pallas import tpu as pltpu

_LANE = 128
_STEP_BYTES = 8 * 1024 * 1024        # real bytes streamed per grid step (all inputs)
_VMEM_FLOOR = 16 * 1024 * 1024
_VMEM_CEIL = 48 * 1024 * 1024
_BATCH_CAP = 512                     # row-block cap for the ragged (lead, rest) view


def _round_up(n, m):
    return ((n + m - 1) // m) * m


def _sublane_granule(dtype):
    # Packed sub-32-bit dtypes want wider sublane groups: f32 -> 8, bf16 -> 16,
    # int8/bool -> 32.
    return 32 // jnp.dtype(dtype).itemsize


def _make_sum_kernel(t0, t1, d0, d1, has_mask, mask0, mask1):
    """Sum of (x - y)^2 [* mask] over one (t0, t1) tile of a (d0, d1) view.

    mask0/mask1 statically enable bound masking for ragged tiles along that axis
    (out-of-bounds VMEM contents are undefined, so we select, not multiply)."""

    def kernel(*refs):
        if has_mask:
            x_ref, y_ref, m_ref, o_ref = refs
        else:
            x_ref, y_ref, o_ref = refs
        x = x_ref[...].astype(jnp.float32)
        y = y_ref[...].astype(jnp.float32)
        d = x - y
        v = d * d
        if has_mask:
            v = v * m_ref[...].astype(jnp.float32)
        if mask0:
            i0 = pl.program_id(0) * t0 + lax.broadcasted_iota(jnp.int32, (t0, t1), 0)
            v = jnp.where(i0 < d0, v, 0.0)
        if mask1:
            i1 = pl.program_id(1) * t1 + lax.broadcasted_iota(jnp.int32, (t0, t1), 1)
            v = jnp.where(i1 < d1, v, 0.0)
        o_ref[0, 0] = jnp.sum(v)

    return kernel


def masked_mse1(x, y, mask=None, cal_mean=True):
    """JAX/Pallas equivalent of MaskedMSE1.forward."""
    assert x.shape == y.shape and x.ndim >= 3, "expected (..., C, H, W) inputs"
    if mask is not None:
        assert mask.shape == x.shape

    shape = x.shape
    total_elems = math.prod(shape)
    lead = math.prod(shape[:-3])          # number of terms averaged by .mean()

    inputs = [x, y] + ([mask] if mask is not None else [])
    itemsizes = [jnp.dtype(a.dtype).itemsize for a in inputs]
    granule = max(_sublane_granule(a.dtype) for a in inputs)
    has_mask = mask is not None

    if total_elems % _LANE == 0:
        # Lane-dense path: free reshape of the whole tensor to (rows, 128).
        d0, d1 = total_elems // _LANE, _LANE
        row_bytes = _LANE * sum(itemsizes)
        if d0 <= 2 * granule:
            t0, g0 = d0, 1                               # tiny: one full-extent tile
        else:
            t0 = max(granule, (_STEP_BYTES // row_bytes) // granule * granule)
            g0 = pl.cdiv(d0, t0)
            if g0 == 1:
                g0 = 2                                   # give both v7x TCs work
            t0 = _round_up(pl.cdiv(d0, g0), granule)     # balanced tiles
            g0 = pl.cdiv(d0, t0)
        t1, g1 = d1, 1
        mask0, mask1 = g0 * t0 > d0, False
        footprint = t0 * t1 * sum(itemsizes)
    else:
        # Ragged path: free (lead_rows, rest) view; bound-mask tails in-kernel
        # instead of taking a padded copy of every input.
        d0 = shape[0]
        d1 = total_elems // d0
        if d0 <= _BATCH_CAP:
            t0, g0, mask0 = d0, 1, False                 # block == full dim allowed
        else:
            t0 = _round_up(_BATCH_CAP, granule)
            g0 = pl.cdiv(d0, t0)
            mask0 = g0 * t0 > d0
        fp_rows = [_round_up(t0, _sublane_granule(a.dtype)) for a in inputs]
        col_granule_bytes = sum(r * _LANE * s for r, s in zip(fp_rows, itemsizes))
        if d1 <= _LANE:
            t1, g1, mask1 = d1, 1, False                 # block == full dim allowed
        else:
            t1 = max(_LANE, (_STEP_BYTES // col_granule_bytes) * _LANE)
            g1 = pl.cdiv(d1, t1)
            if g1 == 1 and g0 == 1:
                g1 = 2                                   # megacore split
            t1 = _round_up(pl.cdiv(d1, g1), _LANE)
            g1 = pl.cdiv(d1, t1)
            mask1 = g1 * t1 > d1
        footprint = sum(r * t1 * s for r, s in zip(fp_rows, itemsizes))

    views = [a.reshape(d0, d1) for a in inputs]          # contiguous reshape: no copy

    kernel = _make_sum_kernel(t0, t1, d0, d1, has_mask, mask0, mask1)
    in_spec = pl.BlockSpec((t0, t1), lambda i, j: (i, j))
    vmem_limit = int(min(_VMEM_CEIL,
                         max(_VMEM_FLOOR, 2 * footprint + 4 * 1024 * 1024)))

    partials = pl.pallas_call(
        kernel,
        out_shape=jax.ShapeDtypeStruct((g0, g1), jnp.float32),
        grid=(g0, g1),
        in_specs=[in_spec] * len(views),
        out_specs=pl.BlockSpec((1, 1), lambda i, j: (i, j),
                               memory_space=pltpu.SMEM),
        compiler_params=pltpu.CompilerParams(
            dimension_semantics=("parallel", "parallel"),
            vmem_limit_bytes=vmem_limit),
    )(*views)

    total = jnp.sum(partials)                            # == mse.sum()
    if cal_mean:
        return total / lead                              # == .sum(dim=(-3,-2,-1)).mean()
    return total


def _reference(x, y, mask=None, cal_mean=True):
    mse = (x.astype(jnp.float32) - y.astype(jnp.float32)) ** 2
    if mask is not None:
        mse = mse * mask.astype(jnp.float32)
    if cal_mean:
        return mse.sum(axis=(-3, -2, -1)).mean()
    return mse.sum()


if __name__ == "__main__":
    key = jax.random.PRNGKey(0)
    ks = jax.random.split(key, 10)

    def check(x, y, m, cal_mean, rtol, atol):
        out = jax.block_until_ready(masked_mse1(x, y, m, cal_mean=cal_mean))
        ref = _reference(x, y, m, cal_mean=cal_mean)
        assert jnp.allclose(out, ref, rtol=rtol, atol=atol), (out, ref)

    # 1) Lane-aligned shape, f32 mask (single-tile aligned path) + no-mask kernel.
    B, C, H, W = 2, 4, 16, 16
    x = jax.random.normal(ks[0], (B, C, H, W), dtype=jnp.float32)
    y = jax.random.normal(ks[1], (B, C, H, W), dtype=jnp.float32)
    m = (jax.random.uniform(ks[2], (B, C, H, W)) > 0.5).astype(jnp.float32)
    check(x, y, m, True, 1e-5, 1e-5)
    check(x, y, m, False, 1e-5, 1e-5)
    check(x, y, None, True, 1e-5, 1e-5)

    # 2) Lane-aligned with a ragged row-tile tail (in-kernel row masking + 2-tile split).
    x2 = jax.random.normal(ks[3], (2, 4, 16, 20), dtype=jnp.float32)
    y2 = jax.random.normal(ks[4], (2, 4, 16, 20), dtype=jnp.float32)
    m2 = (jax.random.uniform(ks[5], (2, 4, 16, 20)) > 0.5).astype(jnp.float32)
    check(x2, y2, m2, True, 1e-5, 1e-5)
    check(x2, y2, None, False, 1e-5, 1e-5)

    # 3) bf16 inputs + bool mask on an aligned shape (packed-dtype sublane granule).
    x3 = jax.random.normal(ks[6], (B, C, H, W), dtype=jnp.bfloat16)
    y3 = jax.random.normal(ks[7], (B, C, H, W), dtype=jnp.bfloat16)
    m3 = jax.random.uniform(ks[8], (B, C, H, W)) > 0.5
    check(x3, y3, m3, True, 1e-2, 1e-2)

    # 4) Misaligned flattened size -> ragged (lead, rest) view, no padding copies.
    x4 = jax.random.normal(ks[9], (2, 3, 5, 7), dtype=jnp.bfloat16)
    y4 = jax.random.normal(ks[0], (2, 3, 5, 7), dtype=jnp.bfloat16)
    m4 = jax.random.uniform(ks[1], (2, 3, 5, 7)) > 0.5
    check(x4, y4, m4, True, 1e-2, 1e-2)
    check(x4, y4, None, False, 1e-2, 1e-2)

    # 5) Misaligned with a ragged lane-tile tail (in-kernel column masking).
    x5 = jax.random.normal(ks[2], (2, 3, 5, 67), dtype=jnp.float32)
    y5 = jax.random.normal(ks[3], (2, 3, 5, 67), dtype=jnp.float32)
    m5 = (jax.random.uniform(ks[4], (2, 3, 5, 67)) > 0.5).astype(jnp.float32)
    check(x5, y5, m5, True, 1e-5, 1e-5)

    print("KERNEL_OK")
</pallas_src>

<mosaic_0001>
module attributes {stable_mosaic.version = 11 : i64} {
  func.func @kernel(%arg0: i32, %arg1: i32, %arg2: memref<16x128xf32, #tpu.memory_space<vmem>>, %arg3: memref<16x128xf32, #tpu.memory_space<vmem>>, %arg4: memref<16x128xf32, #tpu.memory_space<vmem>>, %arg5: memref<1x1xf32, #tpu.memory_space<smem>>) attributes {dimension_semantics = [#tpu.dimension_semantics<parallel>, #tpu.dimension_semantics<parallel>], iteration_bounds = array<i64: 1, 1>, scalar_prefetch = 0 : i64, scratch_operands = 0 : i64, tpu.core_type = #tpu.core_type<tc>, window_params = [{transform_indices = @transform_0, window_bounds = array<i64: 16, 128>}, {transform_indices = @transform_1, window_bounds = array<i64: 16, 128>}, {transform_indices = @transform_2, window_bounds = array<i64: 16, 128>}, {transform_indices = @transform_3, window_bounds = array<i64: 1, 1>}]} {
    %c0 = arith.constant 0 : index
    %c0_0 = arith.constant 0 : index
    %0 = vector.load %arg2[%c0, %c0_0] : memref<16x128xf32, #tpu.memory_space<vmem>>, vector<16x128xf32>
    %c0_1 = arith.constant 0 : index
    %c0_2 = arith.constant 0 : index
    %1 = vector.load %arg3[%c0_1, %c0_2] : memref<16x128xf32, #tpu.memory_space<vmem>>, vector<16x128xf32>
    %2 = arith.subf %0, %1 : vector<16x128xf32>
    %3 = arith.mulf %2, %2 : vector<16x128xf32>
    %c0_3 = arith.constant 0 : index
    %c0_4 = arith.constant 0 : index
    %4 = vector.load %arg4[%c0_3, %c0_4] : memref<16x128xf32, #tpu.memory_space<vmem>>, vector<16x128xf32>
    %5 = arith.mulf %3, %4 : vector<16x128xf32>
    %6 = vector.shape_cast %5 : vector<16x128xf32> to vector<1x16x128xf32>
    %cst = arith.constant dense<0.000000e+00> : vector<1xf32>
    %7 = vector.multi_reduction <add>, %6, %cst [1, 2] : vector<1x16x128xf32> to vector<1xf32>
    %8 = vector.shape_cast %7 : vector<1xf32> to vector<1x1x1xf32>
    %9 = vector.extract %8[0, 0, 0] : f32 from vector<1x1x1xf32>
    %c0_5 = arith.constant 0 : index
    %c0_6 = arith.constant 0 : index
    %10 = memref.load %arg5[%c0_5, %c0_6] : memref<1x1xf32, #tpu.memory_space<smem>>
    memref.store %9, %arg5[%c0_5, %c0_6] : memref<1x1xf32, #tpu.memory_space<smem>>
    return
  }
  func.func @transform_0(%arg0: i32, %arg1: i32) -> (i32, i32) {
    %c0_i32 = arith.constant 0 : i32
    return %arg0, %arg1 : i32, i32
  }
  func.func @transform_1(%arg0: i32, %arg1: i32) -> (i32, i32) {
    %c0_i32 = arith.constant 0 : i32
    return %arg0, %arg1 : i32, i32
  }
  func.func @transform_2(%arg0: i32, %arg1: i32) -> (i32, i32) {
    %c0_i32 = arith.constant 0 : i32
    return %arg0, %arg1 : i32, i32
  }
  func.func @transform_3(%arg0: i32, %arg1: i32) -> (i32, i32) {
    %c0_i32 = arith.constant 0 : i32
    return %arg0, %arg1 : i32, i32
  }
}

</mosaic_0001>

<llo_original>
// kernel: tpu_custom_call.1
$region0: #{tpu_custom_call.1}
  #allocation0 [shape = 'u32[]', space=smem, size = 0x4, offset = 0x4, fixed_abs, tag = 'smem constant byte address 0x4 - core index']
  #allocation1 [shape = 'u32[144,128]{1,0:T(1,128)}', space=vmem, size = 0x12000, scoped, tag = 'internal scratch']
  %s0 = inlined_call_operand.hbm [shape: f32[16,128], index: 0, kind: input, shape index: {}]
  %s1 = inlined_call_operand.hbm [shape: f32[16,128], index: 1, kind: input, shape index: {}]
  %s2 = inlined_call_operand.hbm [shape: f32[16,128], index: 2, kind: input, shape index: {}]
  %s3 = inlined_call_operand.hbm [shape: f32[1,1], index: 3, kind: output, shape index: {}]
  %s4 = sld [smem:[#allocation0]]
  $region34: #{tpu_custom_call.1} parent=0
    _
  %s6 = ssub.s32 1, %s4
  %s7 = scalar_select 0, %s6, %s4
  $region1: #{tpu_custom_call.1} parent=0
    #allocation2 [shape = 'u8[8192]{0}', space=vmem, size = 0x2000, scoped, tag = 'input window, operand 0, single buffered']
    #allocation3 [shape = 's32[1]{0}', space=sflag, size = 0x4, scoped, tag = 'scoped memory for tpu_custom_call.1']
    #allocation4 [shape = 's32[1]{0}', space=sflag, size = 0x4, scoped, tag = 'scoped memory for tpu_custom_call.1']
    #allocation5 [shape = 'u8[8192]{0}', space=vmem, size = 0x2000, scoped, tag = 'input window, operand 1, single buffered']
    #allocation6 [shape = 's32[1]{0}', space=sflag, size = 0x4, scoped, tag = 'scoped memory for tpu_custom_call.1']
    #allocation7 [shape = 'u8[8192]{0}', space=vmem, size = 0x2000, scoped, tag = 'input window, operand 2, single buffered']
    #allocation8 [shape = 'u8[512]{0}', space=smem, size = 0x200, scoped, tag = 'output window, operand 0, single buffered']
    %8 = vsyncpa [#allocation3], 0
    %9 = vsyncpa [#allocation6], 0
    %10 = vsyncpa [#allocation4], 0
    // Predicated region
    $region2: #{tpu_custom_call.1} parent=1 // pred_check
      _
    $region3: #{tpu_custom_call.1} parent=1 // pred_check_branch
      %12 = sbr.rel (0) target = $region5
    $region4: #{tpu_custom_call.1} parent=1 // pred_region
      %s14 = ssub.s32 256, 256
      %15 = vsyncadd [#allocation3], %s14
      %s16 = sshll.u32 [#allocation2], 4
      %s17 = int_to_ptr.vmem [resolvable:$true] %s16
      %22 = dma.hbm_to_vmem [thread:$0]  %s0, 256, %s17, [#allocation3], 128, 128, 8
    $region5: #{tpu_custom_call.1} parent=1 // pred_fallthru
      _
    // Predicated region
    $region6: #{tpu_custom_call.1} parent=1 // pred_check
      _
    $region7: #{tpu_custom_call.1} parent=1 // pred_check_branch
      %24 = sbr.rel (0) target = $region9
    $region8: #{tpu_custom_call.1} parent=1 // pred_region
      %s26 = ssub.s32 256, 256
      %27 = vsyncadd [#allocation6], %s26
      %s28 = sshll.u32 [#allocation5], 4
      %s29 = int_to_ptr.vmem [resolvable:$true] %s28
      %34 = dma.hbm_to_vmem [thread:$0]  %s1, 256, %s29, [#allocation6], 128, 128, 8
    $region9: #{tpu_custom_call.1} parent=1 // pred_fallthru
      _
    // Predicated region
    $region10: #{tpu_custom_call.1} parent=1 // pred_check
      _
    $region11: #{tpu_custom_call.1} parent=1 // pred_check_branch
      %36 = sbr.rel (0) target = $region13
    $region12: #{tpu_custom_call.1} parent=1 // pred_region
      %s38 = ssub.s32 256, 256
      %39 = vsyncadd [#allocation6], %s38
      %s40 = sshll.u32 [#allocation7], 4
      %s41 = int_to_ptr.vmem [resolvable:$true] %s40
      %46 = dma.hbm_to_vmem [thread:$0]  %s2, 256, %s41, [#allocation6], 128, 128, 8
    $region13: #{tpu_custom_call.1} parent=1 // pred_fallthru
      _
    // Predicated region
    $region14: #{tpu_custom_call.1} parent=1 // pred_check
      _
    $region15: #{tpu_custom_call.1} parent=1 // pred_check_branch
      %48 = sbr.rel (0) target = $region17
    $region16: #{tpu_custom_call.1} parent=1 // pred_region
      %49 = dma.done [#allocation3], 256
    $region17: #{tpu_custom_call.1} parent=1 // pred_fallthru
      _
    // Predicated region
    $region18: #{tpu_custom_call.1} parent=1 // pred_check
      _
    $region19: #{tpu_custom_call.1} parent=1 // pred_check_branch
      %51 = sbr.rel (0) target = $region21
    $region20: #{tpu_custom_call.1} parent=1 // pred_region
      %52 = dma.done [#allocation6], 256
    $region21: #{tpu_custom_call.1} parent=1 // pred_fallthru
      _
    // Predicated region
    $region22: #{tpu_custom_call.1} parent=1 // pred_check
      _
    $region23: #{tpu_custom_call.1} parent=1 // pred_check_branch
      %54 = sbr.rel (0) target = $region25
    $region24: #{tpu_custom_call.1} parent=1 // pred_region
      %55 = dma.done [#allocation6], 256
    $region25: #{tpu_custom_call.1} parent=1 // pred_fallthru
      _
    %v56 = vld [vmem:[#allocation2] sm:$0xff]
    %v57 = vld [vmem:[#allocation2 + $0x8] sm:$0xff]
    %v58 = vld [vmem:[#allocation5] sm:$0xff]
    %v59 = vld [vmem:[#allocation5 + $0x8] sm:$0xff]
    %v60 = vsub.f32 %v56, %v58
    %v61 = vsub.f32 %v57, %v59
    %v62 = vmul.f32 %v60, %v60
    %v63 = vmul.f32 %v61, %v61
    %v64 = vld [vmem:[#allocation7] sm:$0xff]
    %v65 = vld [vmem:[#allocation7 + $0x8] sm:$0xff]
    %v66 = vmul.f32 %v62, %v64
    %v67 = vmul.f32 %v63, %v65
    %v68 = vadd.f32 %v66, %v67
    %69 = vadd.xlane.f32.xlu0 %v68
    %v70 = vpop.xlane.xlu0 %69
    %v71 = vrot.slane %v70, 4
    %v72 = vadd.f32 %v70, %v71
    %v73 = vrot.slane %v72, 2
    %v74 = vadd.f32 %v72, %v73
    %v75 = vrot.slane %v74, 1
    %v76 = vadd.f32 %v74, %v75
    %s77 = vtos %v76
    %s78 = scalar_lea.smem [#allocation8], 0
    %79 = sst [smem:[%s78]] %s77
    // Predicated region
    $region26: #{tpu_custom_call.1} parent=1 // pred_check
      _
    $region27: #{tpu_custom_call.1} parent=1 // pred_check_branch
      %81 = sbr.rel (0) target = $region29
    $region28: #{tpu_custom_call.1} parent=1 // pred_region
      %s83 = ssub.s32 16, 16
      %84 = vsyncadd [#allocation4], %s83
      %87 = dma.smem_to_hbm [#allocation8], 16, %s3, [#allocation4]
    $region29: #{tpu_custom_call.1} parent=1 // pred_fallthru
      _
    // Predicated region
    $region30: #{tpu_custom_call.1} parent=1 // pred_check
      _
    $region31: #{tpu_custom_call.1} parent=1 // pred_check_branch
      %89 = sbr.rel (0) target = $region33
    $region32: #{tpu_custom_call.1} parent=1 // pred_region
      %90 = dma.done [#allocation4], 16
    $region33: #{tpu_custom_call.1} parent=1 // pred_fallthru
      _
    %91 = sfence
    %92 = vsyncpa [#allocation3], 1
    %93 = vsyncpa [#allocation6], 1
    %94 = vsyncpa [#allocation4], 1

</llo_original>
